<compile_context>
chip_gen: v7x
topology: tpu7x:2x2x1
jax: 0.10.0
libtpu: 0.0.40
codegen_flags: <defaults>
</compile_context>

<pallas_src>
import jax
import jax.numpy as jnp
from jax.experimental import pallas as pl
from jax.experimental.pallas import tpu as pltpu


_TARGET_TILE_BYTES = 2 * 1024 * 1024  # ~2 MiB per buffer; x2 (in+out) x2 (double-buffer) = 8 MiB


def _round_up(a, b):
    return ((a + b - 1) // b) * b


def _choose_block_rows(rows, itemsize):
    """Pick block_rows for a (rows, 128) slab of elements of size `itemsize`."""
    sub = 8 * max(1, 4 // itemsize)          # sublane packing: 8 (f32), 16 (bf16)
    if rows <= 512:
        return rows                          # single full-extent block, zero per-step overhead
    max_rows = max(sub, _TARGET_TILE_BYTES // (128 * itemsize))
    steps = max(2, pl.cdiv(rows, max_rows))
    if steps % 2:
        steps += 1                           # even step count -> both v7x TCs get equal work
    return min(max_rows, _round_up(pl.cdiv(rows, steps), sub))


def _make_kernel(scale0, scale1, inv01, lower_bound):
    """Build the elementwise kernel with all scales baked in as immediates."""
    half_s1 = 0.5 * scale1

    def kernel(x_ref, o_ref):
        x = x_ref[...].astype(jnp.float32)
        # fake-quantize the raw input: integer levels in [lower_bound, 127]
        q0 = jnp.clip(jnp.round(x * scale0), lower_bound, 127.0)
        # sigmoid via one tanh (single EUP push); quant scale folded into the
        # mul+add; sigmoid >= 0 so only the upper clamp is needed.
        q1 = jnp.minimum(jnp.round(jnp.tanh(0.5 * x) * half_s1 + half_s1), 127.0)
        # one combined dequant multiply instead of two divides
        o_ref[...] = ((q0 * q1) * inv01).astype(o_ref.dtype)

    return kernel


def _quant_silu_jnp(x, scale0, scale1, inv01, lower_bound):
    """Plain-jnp path (small inputs / <128-element tail); same math as kernel."""
    xf = x.astype(jnp.float32)
    q0 = jnp.clip(jnp.round(xf * scale0), lower_bound, 127.0)
    half = 0.5 * scale1
    q1 = jnp.minimum(jnp.round(jnp.tanh(0.5 * xf) * half + half), 127.0)
    return ((q0 * q1) * inv01).astype(x.dtype)


def quant_silu(x, amax_input=4.0, amax_sigmoid=1.0, *,
               narrow_range=True, min_pallas_elems=16 * 1024):
    """QuantSiLU forward.  x: NCHW (or any-shape) float array."""
    amax_input = float(amax_input)
    amax_sigmoid = float(amax_sigmoid)
    scale0 = 127.0 / amax_input
    scale1 = 127.0 / amax_sigmoid
    inv01 = (amax_input / 127.0) * (amax_sigmoid / 127.0)
    lower = -127.0 if narrow_range else -128.0  # pytorch_quantization default: narrow_range

    total = x.size
    if total == 0:
        return x

    # Small-input fast path: let XLA fuse it; Pallas launch cost would dominate.
    if total < max(min_pallas_elems, 128):
        return _quant_silu_jnp(x, scale0, scale1, inv01, lower)

    lanes = 128
    rows = total // lanes
    n_bulk = rows * lanes

    x_flat = jnp.reshape(x, (total,))
    bulk = jnp.reshape(x_flat[:n_bulk], (rows, lanes)) if n_bulk != total \
        else jnp.reshape(x_flat, (rows, lanes))

    itemsize = jnp.dtype(x.dtype).itemsize
    block_rows = _choose_block_rows(rows, itemsize)
    grid = (pl.cdiv(rows, block_rows),)

    out_bulk = pl.pallas_call(
        _make_kernel(scale0, scale1, inv01, lower),
        out_shape=jax.ShapeDtypeStruct((rows, lanes), x.dtype),
        grid=grid,
        in_specs=[pl.BlockSpec((block_rows, lanes), lambda i: (i, 0))],
        out_specs=pl.BlockSpec((block_rows, lanes), lambda i: (i, 0)),
        compiler_params=pltpu.CompilerParams(
            dimension_semantics=("parallel",)),
        cost_estimate=pl.CostEstimate(
            flops=11 * n_bulk,
            transcendentals=n_bulk,
            bytes_accessed=2 * itemsize * n_bulk),
    )(bulk)

    if n_bulk == total:
        out_flat = jnp.reshape(out_bulk, (total,))
    else:
        # <128-element tail handled by plain jnp (no full-tensor pad/slice pass)
        tail_out = _quant_silu_jnp(x_flat[n_bulk:], scale0, scale1, inv01, lower)
        out_flat = jnp.concatenate([jnp.reshape(out_bulk, (n_bulk,)), tail_out])
    return jnp.reshape(out_flat, x.shape)


def quant_silu_ref(x, amax_input=4.0, amax_sigmoid=1.0, *, narrow_range=True):
    """Pure-JAX reference (exp-based sigmoid) mirroring the PyTorch module."""
    x = x.astype(jnp.float32)
    lower = -127.0 if narrow_range else -128.0
    s0 = 127.0 / amax_input
    q0 = jnp.clip(jnp.round(x * s0), lower, 127.0) / s0
    s1 = 127.0 / amax_sigmoid
    q1 = jnp.clip(jnp.round(jax.nn.sigmoid(x) * s1), lower, 127.0) / s1
    return q0 * q1


def _check(out, ref, amax_input, amax_sigmoid):
    # The kernel's tanh-based sigmoid may differ from the exp-based reference
    # by a few ULPs, flipping an exact .5 rounding tie by one 8-bit level on
    # the sigmoid branch.  Allow at most that, and require the overwhelming
    # majority of elements to match exactly.
    err = jnp.abs(out - ref)
    one_level = 127.0 * (amax_input / 127.0) * (amax_sigmoid / 127.0)
    assert float(jnp.max(err)) <= one_level + 1e-5, "mismatch vs reference"
    n_exact = int(jnp.sum(err <= 1e-5))
    assert n_exact >= int(0.99 * err.size), "too many off-by-one-level elements"


if __name__ == "__main__":
    key = jax.random.PRNGKey(0)
    # NCHW input, small shape (2048 elements, 128-aligned -> pure kernel path)
    x = jax.random.normal(key, (2, 4, 16, 16), dtype=jnp.float32) * 2.0

    # Deterministic "calibrated" amax values (stand-in for histogram calib).
    amax_input = 4.0
    amax_sigmoid = 1.0

    # Force the Pallas path (the default small-input fast path would skip it
    # for a tensor this tiny).
    out = quant_silu(x, amax_input, amax_sigmoid, min_pallas_elems=0)
    out = jax.block_until_ready(out)
    assert out.shape == x.shape and out.dtype == x.dtype
    _check(out, quant_silu_ref(x, amax_input, amax_sigmoid), amax_input, amax_sigmoid)

    # Unaligned size (1155 elements = 9*128 + 3) -> exercises bulk + jnp tail.
    x2 = jax.random.normal(jax.random.PRNGKey(1), (3, 5, 7, 11), dtype=jnp.float32)
    out2 = jax.block_until_ready(
        quant_silu(x2, amax_input, amax_sigmoid, min_pallas_elems=0))
    assert out2.shape == x2.shape and out2.dtype == x2.dtype
    _check(out2, quant_silu_ref(x2, amax_input, amax_sigmoid), amax_input, amax_sigmoid)

    # Default path for tiny tensors (fused-XLA fast path) stays consistent.
    out3 = jax.block_until_ready(quant_silu(x, amax_input, amax_sigmoid))
    _check(out3, quant_silu_ref(x, amax_input, amax_sigmoid), amax_input, amax_sigmoid)

    print("KERNEL_OK")
</pallas_src>

<mosaic_0001>
module attributes {stable_mosaic.version = 11 : i64} {
  func.func @kernel(%arg0: i32, %arg1: memref<16x128xf32, #tpu.memory_space<vmem>>, %arg2: memref<16x128xf32, #tpu.memory_space<vmem>>) attributes {dimension_semantics = [#tpu.dimension_semantics<parallel>], iteration_bounds = array<i64: 1>, scalar_prefetch = 0 : i64, scratch_operands = 0 : i64, tpu.core_type = #tpu.core_type<tc>, window_params = [{transform_indices = @transform_0, window_bounds = array<i64: 16, 128>}, {transform_indices = @transform_1, window_bounds = array<i64: 16, 128>}]} {
    %c0 = arith.constant 0 : index
    %c0_0 = arith.constant 0 : index
    %0 = vector.load %arg1[%c0, %c0_0] : memref<16x128xf32, #tpu.memory_space<vmem>>, vector<16x128xf32>
    %cst = arith.constant 3.175000e+01 : f32
    %1 = vector.broadcast %cst : f32 to vector<16x128xf32>
    %2 = arith.mulf %0, %1 : vector<16x128xf32>
    %3 = math.roundeven %2 : vector<16x128xf32>
    %cst_1 = arith.constant -1.270000e+02 : f32
    %cst_2 = arith.constant 1.270000e+02 : f32
    %4 = vector.broadcast %cst_1 : f32 to vector<16x128xf32>
    %5 = arith.maximumf %4, %3 : vector<16x128xf32>
    %6 = vector.broadcast %cst_2 : f32 to vector<16x128xf32>
    %7 = arith.minimumf %6, %5 : vector<16x128xf32>
    %cst_3 = arith.constant 5.000000e-01 : f32
    %8 = vector.broadcast %cst_3 : f32 to vector<16x128xf32>
    %9 = arith.mulf %8, %0 : vector<16x128xf32>
    %10 = math.tanh %9 : vector<16x128xf32>
    %cst_4 = arith.constant 6.350000e+01 : f32
    %11 = vector.broadcast %cst_4 : f32 to vector<16x128xf32>
    %12 = arith.mulf %10, %11 : vector<16x128xf32>
    %cst_5 = arith.constant 6.350000e+01 : f32
    %13 = vector.broadcast %cst_5 : f32 to vector<16x128xf32>
    %14 = arith.addf %12, %13 : vector<16x128xf32>
    %15 = math.roundeven %14 : vector<16x128xf32>
    %cst_6 = arith.constant 1.270000e+02 : f32
    %16 = vector.broadcast %cst_6 : f32 to vector<16x128xf32>
    %17 = arith.minimumf %15, %16 : vector<16x128xf32>
    %18 = arith.mulf %7, %17 : vector<16x128xf32>
    %cst_7 = arith.constant 2.48000491E-4 : f32
    %19 = vector.broadcast %cst_7 : f32 to vector<16x128xf32>
    %20 = arith.mulf %18, %19 : vector<16x128xf32>
    %c0_8 = arith.constant 0 : index
    %c0_9 = arith.constant 0 : index
    %21 = vector.load %arg2[%c0_8, %c0_9] : memref<16x128xf32, #tpu.memory_space<vmem>>, vector<16x128xf32>
    tpu.vector_store %arg2[%c0_8, %c0_9], %20 {strides = array<i32>} : memref<16x128xf32, #tpu.memory_space<vmem>>, vector<16x128xf32>,
    return
  }
  func.func @transform_0(%arg0: i32) -> (i32, i32) {
    %c0_i32 = arith.constant 0 : i32
    %c0_i32_0 = arith.constant 0 : i32
    return %arg0, %c0_i32 : i32, i32
  }
  func.func @transform_1(%arg0: i32) -> (i32, i32) {
    %c0_i32 = arith.constant 0 : i32
    %c0_i32_0 = arith.constant 0 : i32
    return %arg0, %c0_i32 : i32, i32
  }
}

</mosaic_0001>

<llo_original>
// kernel: tpu_custom_call.1
$region0: #{tpu_custom_call.1}
  #allocation0 [shape = 'u32[]', space=smem, size = 0x4, offset = 0x4, fixed_abs, tag = 'smem constant byte address 0x4 - core index']
  #allocation1 [shape = 'u32[144,128]{1,0:T(1,128)}', space=vmem, size = 0x12000, scoped, tag = 'internal scratch']
  %s0 = inlined_call_operand.hbm [shape: f32[16,128], index: 0, kind: input, shape index: {}]
  %s1 = inlined_call_operand.hbm [shape: f32[16,128], index: 1, kind: output, shape index: {}]
  %s2 = sld [smem:[#allocation0]]
  $region18: #{tpu_custom_call.1} parent=0
    _
  %s4 = ssub.s32 1, %s2
  %s5 = scalar_select 0, %s4, %s2
  $region1: #{tpu_custom_call.1} parent=0
    #allocation2 [shape = 'u8[8192]{0}', space=vmem, size = 0x2000, scoped, tag = 'input window, operand 0, single buffered']
    #allocation3 [shape = 's32[1]{0}', space=sflag, size = 0x4, scoped, tag = 'scoped memory for tpu_custom_call.1']
    #allocation4 [shape = 's32[1]{0}', space=sflag, size = 0x4, scoped, tag = 'scoped memory for tpu_custom_call.1']
    #allocation5 [shape = 'u8[8192]{0}', space=vmem, size = 0x2000, scoped, tag = 'output window, operand 0, single buffered']
    %6 = vsyncpa [#allocation3], 0
    %7 = vsyncpa [#allocation4], 0
    // Predicated region
    $region2: #{tpu_custom_call.1} parent=1 // pred_check
      _
    $region3: #{tpu_custom_call.1} parent=1 // pred_check_branch
      %9 = sbr.rel (0) target = $region5
    $region4: #{tpu_custom_call.1} parent=1 // pred_region
      %s11 = ssub.s32 256, 256
      %12 = vsyncadd [#allocation3], %s11
      %s13 = sshll.u32 [#allocation2], 4
      %s14 = int_to_ptr.vmem [resolvable:$true] %s13
      %19 = dma.hbm_to_vmem [thread:$0]  %s0, 256, %s14, [#allocation3], 128, 128, 8
    $region5: #{tpu_custom_call.1} parent=1 // pred_fallthru
      _
    // Predicated region
    $region6: #{tpu_custom_call.1} parent=1 // pred_check
      _
    $region7: #{tpu_custom_call.1} parent=1 // pred_check_branch
      %21 = sbr.rel (0) target = $region9
    $region8: #{tpu_custom_call.1} parent=1 // pred_region
      %22 = dma.done [#allocation3], 256
    $region9: #{tpu_custom_call.1} parent=1 // pred_fallthru
      _
    %v23 = vld [vmem:[#allocation2] sm:$0xff]
    %v24 = vld [vmem:[#allocation2 + $0x8] sm:$0xff]
    %v25 = vmul.f32 %v23, 31.75
    %v26 = vmul.f32 %v24, 31.75
    %v27 = vround.ne.pseudo %v25
    %v28 = vround.ne.pseudo %v26
    %v29 = vmax.f32 %v27, -127.0
    %v30 = vmax.f32 %v28, -127.0
    %v31 = vmin.f32 %v29, 127.0
    %v32 = vmin.f32 %v30, 127.0
    %v33 = vmul.f32 %v23, 0.5
    %v34 = vmul.f32 %v24, 0.5
    %v35 = vtanh.pop %v33
    %v36 = vtanh.pop %v34
    %v37 = vmul.f32 %v35, 63.5
    %v38 = vmul.f32 %v36, 63.5
    %v39 = vadd.f32 %v37, 63.5
    %v40 = vadd.f32 %v38, 63.5
    %v41 = vround.ne.pseudo %v39
    %v42 = vround.ne.pseudo %v40
    %v43 = vmin.f32 %v41, 127.0
    %v44 = vmin.f32 %v42, 127.0
    %v45 = vmul.f32 %v31, %v43
    %v46 = vmul.f32 %v32, %v44
    %v47 = vmul.f32 %v45, 0.0002480005
    %v48 = vmul.f32 %v46, 0.0002480005
    %49 = vst [vmem:[#allocation5] sm:$0xff] %v47
    %50 = vst [vmem:[#allocation5 + $0x8] sm:$0xff] %v48
    // Predicated region
    $region10: #{tpu_custom_call.1} parent=1 // pred_check
      _
    $region11: #{tpu_custom_call.1} parent=1 // pred_check_branch
      %52 = sbr.rel (0) target = $region13
    $region12: #{tpu_custom_call.1} parent=1 // pred_region
      %s54 = ssub.s32 256, 256
      %55 = vsyncadd [#allocation4], %s54
      %s56 = sshll.u32 [#allocation5], 4
      %s57 = int_to_ptr.vmem [resolvable:$true] %s56
      %62 = dma.vmem_to_hbm [thread:$0]  %s57, 256, %s1, [#allocation4], 128, 128, 8
    $region13: #{tpu_custom_call.1} parent=1 // pred_fallthru
      _
    // Predicated region
    $region14: #{tpu_custom_call.1} parent=1 // pred_check
      _
    $region15: #{tpu_custom_call.1} parent=1 // pred_check_branch
      %64 = sbr.rel (0) target = $region17
    $region16: #{tpu_custom_call.1} parent=1 // pred_region
      %65 = dma.done [#allocation4], 256
    $region17: #{tpu_custom_call.1} parent=1 // pred_fallthru
      _
    %66 = vsyncpa [#allocation3], 1
    %67 = vsyncpa [#allocation4], 1

</llo_original>
